<compile_context>
chip_gen: v5e
topology: v5e:2x2
jax: 0.10.0
libtpu: 0.0.40
codegen_flags: <defaults>
</compile_context>

<pallas_src>
import functools

import jax
import jax.numpy as jnp
from jax.experimental import pallas as pl
from jax.experimental.pallas import tpu as pltpu


# --------------------------------------------------------------------------------------
# Kernel
# --------------------------------------------------------------------------------------
def _dice_ce_kernel(x_ref, y_ref, tp_ref, sp_ref, cnt_ref, ce_ref, *,
                    hw, tile, t_per_core, needs_mask):
    """Accumulate dice/CE statistics for one (C, TILE) logits tile.

    x_ref:   (C, TILE) float logits  (classes on sublanes, pixels on lanes)
    y_ref:   (1, TILE) integer labels
    tp_ref / sp_ref / cnt_ref: (C, 1) f32 accumulators (resident per core-row)
    ce_ref:  (1, 1) f32 accumulator  (sum of -log softmax[target])
    """
    b = pl.program_id(1)
    t = pl.program_id(2)

    @pl.when(jnp.logical_and(b == 0, t == 0))
    def _():
        tp_ref[...] = jnp.zeros_like(tp_ref)
        sp_ref[...] = jnp.zeros_like(sp_ref)
        cnt_ref[...] = jnp.zeros_like(cnt_ref)
        ce_ref[...] = jnp.zeros_like(ce_ref)

    x = x_ref[...].astype(jnp.float32)                         # (C, TILE)
    y = y_ref[...].astype(jnp.int32)                           # (1, TILE)
    c, tn = x.shape

    # One-hot mask: compare a constant (C, 1) class-id column against the label row.
    class_ids = jax.lax.broadcasted_iota(jnp.int32, (c, 1), 0)
    onehot_f = (class_ids == y).astype(jnp.float32)            # (C, TILE)

    # Numerically-stable softmax / log-softmax over the small class (sublane) axis.
    m = jnp.max(x, axis=0, keepdims=True)                      # (1, TILE)
    e = jnp.exp(x - m)                                         # (C, TILE)
    s = jnp.sum(e, axis=0, keepdims=True)                      # (1, TILE)
    probs = e * pl.reciprocal(s, approx=True)                  # EUP, one recip per pixel
    lse = m + jnp.log(s)                                       # (1, TILE)
    picked = jnp.sum(x * onehot_f, axis=0, keepdims=True)      # logit at target class
    ce_pix = lse - picked                                      # (1, TILE) per-pixel CE
    tp_pix = probs * onehot_f                                  # (C, TILE)

    def _acc(tp_src, sp_src, cnt_src, ce_src):
        # Per-class lane reductions; fp/fn are derived from these in the wrapper.
        tp_ref[...] += jnp.sum(tp_src, axis=1, keepdims=True)        # (C, 1)
        sp_ref[...] += jnp.sum(sp_src, axis=1, keepdims=True)        # (C, 1)
        cnt_ref[...] += jnp.sum(cnt_src, axis=1, keepdims=True)      # (C, 1)
        ce_ref[...] += jnp.sum(ce_src).reshape(1, 1)

    if not needs_mask:
        _acc(tp_pix, probs, onehot_f, ce_pix)
    else:
        # Tail-only masking: the full-tile fast path pays nothing; only tiles that
        # overhang the true pixel count run the iota/where sequence.
        p = pl.program_id(0)
        start = (p * t_per_core + t) * tile
        is_full = (start + tile) <= hw

        @pl.when(is_full)
        def _():
            _acc(tp_pix, probs, onehot_f, ce_pix)

        @pl.when(jnp.logical_not(is_full))
        def _():
            lane = jax.lax.broadcasted_iota(jnp.int32, (1, tn), 1)
            valid = (start + lane) < hw                        # (1, TILE) bool
            zc = jnp.zeros_like(tp_pix)
            zr = jnp.zeros_like(ce_pix)
            # jnp.where (select) kills NaN/Inf coming from undefined out-of-bounds lanes.
            _acc(jnp.where(valid, tp_pix, zc),
                 jnp.where(valid, probs, zc),
                 jnp.where(valid, onehot_f, zc),
                 jnp.where(valid, ce_pix, zr))


# --------------------------------------------------------------------------------------
# Static helpers (all plain Python ints / hardware queries, resolved before jit)
# --------------------------------------------------------------------------------------
def _round_up(x, m):
    return (x + m - 1) // m * m


def _detect_vmem_bytes():
    """Physical VMEM capacity; conservative (v7x-sized) fallback if the query fails."""
    try:
        info = pltpu.get_tpu_info()
        v = int(getattr(info, "vmem_capacity_bytes", 0) or 0)
        if v > 0:
            return v
    except Exception:
        pass
    return 64 * 1024 * 1024


def _detect_num_cores():
    """TensorCores addressable by one pallas_call (2 on v7x); safe fallback 1."""
    try:
        info = pltpu.get_tpu_info()
        for name in ("num_cores", "num_tensorcores", "tensorcore_count", "cores_per_chip"):
            v = getattr(info, name, None)
            if isinstance(v, int) and v >= 1:
                return min(int(v), 2)
    except Exception:
        pass
    return 1


def _pick_tile(hw, cap, target, num_cores):
    """Choose a pixel tile (multiple of 128, <= cap).  Prefers an exact divisor of hw
    whose tile count is aligned to num_cores so the mask path compiles out entirely."""
    cap = max(128, (cap // 128) * 128)
    target = max(128, min((int(target) // 128) * 128, cap))
    if hw <= target:
        return _round_up(hw, 128)                 # single tile per batch element
    if hw % 128 == 0:
        k0 = -(-hw // target)                     # ceil(hw / target)
        for k in range(k0, min(k0 + 64, hw // 128) + 1):
            if hw % k == 0:
                t = hw // k
                if t % 128 == 0 and k % num_cores == 0:
                    return t
    return target                                 # ragged tail handled by tail-only mask


# --------------------------------------------------------------------------------------
# Jitted implementation
# --------------------------------------------------------------------------------------
@functools.partial(jax.jit, static_argnames=("weight_ce", "weight_dice", "smooth",
                                             "tile", "num_cores", "vmem_limit"))
def _dc_and_ce_loss_impl(net_output, target, *, weight_ce, weight_dice, smooth,
                         tile, num_cores, vmem_limit):
    B, C, H, W = net_output.shape
    HW = H * W

    # Native class-major layout: free reshapes, no HBM transpose, no dtype cast
    # (bf16 logits stream as-is; the kernel upcasts in-register).
    x = net_output.reshape(B, C, HW)
    y = target.reshape(B, 1, HW)

    if HW < tile:
        # Small image: single (128-aligned) tile per batch element; pad copy is tiny.
        hw_arr = tile
        x = jnp.pad(x, ((0, 0), (0, 0), (0, hw_arr - HW)))
        y = jnp.pad(y, ((0, 0), (0, 0), (0, hw_arr - HW)))
    else:
        hw_arr = HW                  # never pad/copy the big tensor; mask the ragged tail

    t_total = pl.cdiv(hw_arr, tile)              # blocks per image (last may be partial)
    t_per_core = pl.cdiv(t_total, num_cores)
    # Mask iff the (core, tile) decomposition covers more pixels than really exist.
    needs_mask = (num_cores * t_per_core * tile) != HW

    def data_index(p, bb, t):
        # Clamp so duplicated / overhanging core tiles still issue in-bounds DMAs;
        # their contributions are masked out inside the kernel (tail branch).
        return (bb, 0, jnp.minimum(p * t_per_core + t, t_total - 1))

    grid = (num_cores, B, t_per_core)

    kernel = functools.partial(_dice_ce_kernel, hw=HW, tile=tile,
                               t_per_core=t_per_core, needs_mask=needs_mask)

    out_shape = (
        jax.ShapeDtypeStruct((num_cores, C, 1), jnp.float32),   # tp
        jax.ShapeDtypeStruct((num_cores, C, 1), jnp.float32),   # sum(probs)
        jax.ShapeDtypeStruct((num_cores, C, 1), jnp.float32),   # label count
        jax.ShapeDtypeStruct((num_cores, 1, 1), jnp.float32),   # ce sum
    )
    stat_spec = pl.BlockSpec((pl.Squeezed(), C, 1), lambda p, bb, t: (p, 0, 0))
    ce_spec = pl.BlockSpec((pl.Squeezed(), 1, 1), lambda p, bb, t: (p, 0, 0))

    tp, sp, cnt, ce_sum = pl.pallas_call(
        kernel,
        out_shape=out_shape,
        grid=grid,
        in_specs=[
            pl.BlockSpec((pl.Squeezed(), C, tile), data_index),
            pl.BlockSpec((pl.Squeezed(), 1, tile), data_index),
        ],
        out_specs=(stat_spec, stat_spec, stat_spec, ce_spec),
        compiler_params=pltpu.CompilerParams(
            dimension_semantics=("parallel", "arbitrary", "arbitrary"),
            vmem_limit_bytes=vmem_limit),
    )(x, y)

    # Combine per-core partial rows; derive fp / fn algebraically.
    tp = tp[..., 0].sum(axis=0)                  # (C,)
    sp = sp[..., 0].sum(axis=0)
    cnt = cnt[..., 0].sum(axis=0)
    fp = sp - tp
    fn = cnt - tp

    # SoftDiceLoss: batch_dice=True, do_bg=False, denominator clamped like nnU-Net.
    nominator = 2.0 * tp + smooth
    denominator = jnp.maximum(2.0 * tp + fp + fn + smooth, 1e-8)
    dc = nominator / denominator
    dc_loss = -jnp.mean(dc[1:])                  # drop background class

    # RobustCrossEntropyLoss: mean over all B*H*W pixels.
    ce_loss = ce_sum.sum() / jnp.float32(B * HW)

    return weight_ce * ce_loss + weight_dice * dc_loss


# --------------------------------------------------------------------------------------
# Public wrapper: resolves hardware-derived static parameters, then calls the jitted impl.
# --------------------------------------------------------------------------------------
def dc_and_ce_loss(net_output, target, *, weight_ce=1.0, weight_dice=1.0,
                   smooth=1e-5, tile_n=None, num_cores=None):
    """net_output: (B, C, H, W) float logits; target: (B, 1, H, W) integer labels.

    tile_n:     pixel-tile target (default 65536); always clamped by a VMEM-derived cap
                so the kernel fits on v5e/v6e (128 MiB VMEM) and v7x (64 MiB).
    num_cores:  TensorCores to shard the pixel stream across (auto-detected, <= 2).
    """
    B, C, H, W = net_output.shape
    assert target.shape == (B, 1, H, W)
    HW = H * W

    if num_cores is None:
        num_cores = _detect_num_cores()
    num_cores = max(1, int(num_cores))

    y_bytes = jnp.dtype(target.dtype).itemsize
    x_bytes = jnp.dtype(net_output.dtype).itemsize

    # VMEM-derived tile cap: double-buffered inputs + allowance for the live f32 (C, TILE)
    # temporaries the kernel body keeps (x, onehot, exp, probs, products, ...).
    phys_vmem = _detect_vmem_bytes()
    vmem_limit = min(phys_vmem * 3 // 4, 112 * 1024 * 1024)
    per_pixel = 2 * (x_bytes * C + y_bytes) + 8 * 4 * C + 12 * 4
    tile_cap = max(128, (vmem_limit * 3 // 4) // per_pixel // 128 * 128)

    target_tile = 65536 if tile_n is None else int(tile_n)
    tile = _pick_tile(HW, tile_cap, target_tile, num_cores)

    return _dc_and_ce_loss_impl(
        net_output, target,
        weight_ce=float(weight_ce), weight_dice=float(weight_dice), smooth=float(smooth),
        tile=int(tile), num_cores=int(num_cores), vmem_limit=int(vmem_limit))


# --------------------------------------------------------------------------------------
# Pure-JAX reference (independent math) for sanity checks.
# --------------------------------------------------------------------------------------
def _reference_loss(net_output, target, weight_ce=1.0, weight_dice=1.0, smooth=1e-5):
    B, C, H, W = net_output.shape
    x = jnp.transpose(net_output, (0, 2, 3, 1)).reshape(-1, C).astype(jnp.float32)
    y = target[:, 0].reshape(-1).astype(jnp.int32)
    probs = jax.nn.softmax(x, axis=-1)
    onehot = jax.nn.one_hot(y, C, dtype=jnp.float32)
    tp = jnp.sum(probs * onehot, axis=0)
    fp = jnp.sum(probs * (1.0 - onehot), axis=0)
    fn = jnp.sum((1.0 - probs) * onehot, axis=0)
    dc = (2.0 * tp + smooth) / jnp.maximum(2.0 * tp + fp + fn + smooth, 1e-8)
    dc_loss = -jnp.mean(dc[1:])
    logp = jax.nn.log_softmax(x, axis=-1)
    ce_loss = -jnp.mean(jnp.sum(logp * onehot, axis=-1))
    return weight_ce * ce_loss + weight_dice * dc_loss


if __name__ == "__main__":
    key = jax.random.PRNGKey(0)
    k1, k2, k3, k4, k5, k6 = jax.random.split(key, 6)

    TOL = dict(atol=2e-3, rtol=2e-3)   # pl.reciprocal(approx=True) in the softmax

    # Primary config from the module spec (single-tile fast path, no masking).
    B, C, H, W = 2, 4, 16, 16
    net_output = jax.random.normal(k1, (B, C, H, W), dtype=jnp.float32)
    target = jax.random.randint(k2, (B, 1, H, W), 0, C, dtype=jnp.int32)
    ref = _reference_loss(net_output, target)

    loss = jax.block_until_ready(dc_and_ce_loss(net_output, target))
    assert jnp.allclose(loss, ref, **TOL), (loss, ref)

    # Explicit dual-TensorCore path (per-core accumulator rows; still correct on 1-TC chips).
    loss2 = jax.block_until_ready(dc_and_ce_loss(net_output, target, num_cores=2))
    assert jnp.allclose(loss2, ref, **TOL), (loss2, ref)

    # Ragged spatial size below one tile: padded single tile, tail-masked.
    Br, Cr, Hr, Wr = 2, 4, 12, 12
    net_r = jax.random.normal(k3, (Br, Cr, Hr, Wr), dtype=jnp.float32)
    tgt_r = jax.random.randint(k4, (Br, 1, Hr, Wr), 0, Cr, dtype=jnp.int32)
    loss_r = jax.block_until_ready(dc_and_ce_loss(net_r, tgt_r))
    ref_r = _reference_loss(net_r, tgt_r)
    assert jnp.allclose(loss_r, ref_r, **TOL), (loss_r, ref_r)

    # Multi-tile stream with a ragged tail (fast path on full tiles, masked tail tile),
    # also exercised with the 2-core decomposition (duplicated clamped tiles masked out).
    Bm, Cm, Hm, Wm = 1, 4, 20, 20
    net_m = jax.random.normal(k5, (Bm, Cm, Hm, Wm), dtype=jnp.float32)
    tgt_m = jax.random.randint(k6, (Bm, 1, Hm, Wm), 0, Cm, dtype=jnp.int32)
    ref_m = _reference_loss(net_m, tgt_m)
    loss_m = jax.block_until_ready(dc_and_ce_loss(net_m, tgt_m, tile_n=128))
    assert jnp.allclose(loss_m, ref_m, **TOL), (loss_m, ref_m)
    loss_m2 = jax.block_until_ready(dc_and_ce_loss(net_m, tgt_m, tile_n=128, num_cores=2))
    assert jnp.allclose(loss_m2, ref_m, **TOL), (loss_m2, ref_m)

    print("KERNEL_OK")
</pallas_src>

<mosaic_0001>
module attributes {stable_mosaic.version = 11 : i64} {
  func.func @_dice_ce_kernel(%arg0: i32, %arg1: i32, %arg2: i32, %arg3: memref<1x4x256xf32, #tpu.memory_space<vmem>>, %arg4: memref<1x1x256xi32, #tpu.memory_space<vmem>>, %arg5: memref<1x4x1xf32, #tpu.memory_space<vmem>>, %arg6: memref<1x4x1xf32, #tpu.memory_space<vmem>>, %arg7: memref<1x4x1xf32, #tpu.memory_space<vmem>>, %arg8: memref<1x1x1xf32, #tpu.memory_space<vmem>>) attributes {dimension_semantics = [#tpu.dimension_semantics<parallel>, #tpu.dimension_semantics<arbitrary>, #tpu.dimension_semantics<arbitrary>], iteration_bounds = array<i64: 1, 2, 1>, scalar_prefetch = 0 : i64, scratch_operands = 0 : i64, tpu.core_type = #tpu.core_type<tc>, window_params = [{transform_indices = @transform_0, window_bounds = array<i64: 1, 4, 256>}, {transform_indices = @transform_1, window_bounds = array<i64: 1, 1, 256>}, {transform_indices = @transform_2, window_bounds = array<i64: 1, 4, 1>}, {transform_indices = @transform_3, window_bounds = array<i64: 1, 4, 1>}, {transform_indices = @transform_4, window_bounds = array<i64: 1, 4, 1>}, {transform_indices = @transform_5, window_bounds = array<i64: 1, 1, 1>}]} {
    %c0_i32 = arith.constant 0 : i32
    %0 = arith.cmpi eq, %arg1, %c0_i32 : i32
    %c0_i32_0 = arith.constant 0 : i32
    %1 = arith.cmpi eq, %arg2, %c0_i32_0 : i32
    %2 = arith.andi %0, %1 : i1
    %3 = arith.extui %2 : i1 to i32
    %c0_i32_1 = arith.constant 0 : i32
    %4 = arith.cmpi ne, %3, %c0_i32_1 : i32
    scf.if %4 {
      %cst_37 = arith.constant 0.000000e+00 : f32
      %67 = vector.broadcast %cst_37 : f32 to vector<4x1xf32>
      %c0_38 = arith.constant 0 : index
      %c0_39 = arith.constant 0 : index
      %c0_40 = arith.constant 0 : index
      %68 = vector.load %arg5[%c0_38, %c0_39, %c0_40] : memref<1x4x1xf32, #tpu.memory_space<vmem>>, vector<1x4x1xf32>
      %69 = vector.shape_cast %68 : vector<1x4x1xf32> to vector<4x1xf32>
      %70 = vector.shape_cast %67 : vector<4x1xf32> to vector<1x4x1xf32>
      tpu.vector_store %arg5[%c0_38, %c0_39, %c0_40], %70 {strides = array<i32>} : memref<1x4x1xf32, #tpu.memory_space<vmem>>, vector<1x4x1xf32>,
      %cst_41 = arith.constant 0.000000e+00 : f32
      %71 = vector.broadcast %cst_41 : f32 to vector<4x1xf32>
      %c0_42 = arith.constant 0 : index
      %c0_43 = arith.constant 0 : index
      %c0_44 = arith.constant 0 : index
      %72 = vector.load %arg6[%c0_42, %c0_43, %c0_44] : memref<1x4x1xf32, #tpu.memory_space<vmem>>, vector<1x4x1xf32>
      %73 = vector.shape_cast %72 : vector<1x4x1xf32> to vector<4x1xf32>
      %74 = vector.shape_cast %71 : vector<4x1xf32> to vector<1x4x1xf32>
      tpu.vector_store %arg6[%c0_42, %c0_43, %c0_44], %74 {strides = array<i32>} : memref<1x4x1xf32, #tpu.memory_space<vmem>>, vector<1x4x1xf32>,
      %cst_45 = arith.constant 0.000000e+00 : f32
      %75 = vector.broadcast %cst_45 : f32 to vector<4x1xf32>
      %c0_46 = arith.constant 0 : index
      %c0_47 = arith.constant 0 : index
      %c0_48 = arith.constant 0 : index
      %76 = vector.load %arg7[%c0_46, %c0_47, %c0_48] : memref<1x4x1xf32, #tpu.memory_space<vmem>>, vector<1x4x1xf32>
      %77 = vector.shape_cast %76 : vector<1x4x1xf32> to vector<4x1xf32>
      %78 = vector.shape_cast %75 : vector<4x1xf32> to vector<1x4x1xf32>
      tpu.vector_store %arg7[%c0_46, %c0_47, %c0_48], %78 {strides = array<i32>} : memref<1x4x1xf32, #tpu.memory_space<vmem>>, vector<1x4x1xf32>,
      %cst_49 = arith.constant 0.000000e+00 : f32
      %79 = vector.broadcast %cst_49 : f32 to vector<1x1xf32>
      %c0_50 = arith.constant 0 : index
      %c0_51 = arith.constant 0 : index
      %c0_52 = arith.constant 0 : index
      %80 = vector.load %arg8[%c0_50, %c0_51, %c0_52] : memref<1x1x1xf32, #tpu.memory_space<vmem>>, vector<1x1x1xf32>
      %81 = vector.shape_cast %80 : vector<1x1x1xf32> to vector<1x1xf32>
      %82 = vector.shape_cast %79 : vector<1x1xf32> to vector<1x1x1xf32>
      tpu.vector_store %arg8[%c0_50, %c0_51, %c0_52], %82 {strides = array<i32>} : memref<1x1x1xf32, #tpu.memory_space<vmem>>, vector<1x1x1xf32>,
    } else {
    }
    %c0 = arith.constant 0 : index
    %c0_2 = arith.constant 0 : index
    %c0_3 = arith.constant 0 : index
    %5 = vector.load %arg3[%c0, %c0_2, %c0_3] : memref<1x4x256xf32, #tpu.memory_space<vmem>>, vector<1x4x256xf32>
    %6 = vector.shape_cast %5 : vector<1x4x256xf32> to vector<4x256xf32>
    %c0_4 = arith.constant 0 : index
    %c0_5 = arith.constant 0 : index
    %c0_6 = arith.constant 0 : index
    %7 = vector.load %arg4[%c0_4, %c0_5, %c0_6] : memref<1x1x256xi32, #tpu.memory_space<vmem>>, vector<1x1x256xi32>
    %8 = vector.shape_cast %7 : vector<1x1x256xi32> to vector<1x256xi32>
    %9 = tpu.iota {dimensions = array<i32: 0>} : vector<4x1xi32>
    %10 = vector.broadcast %9 : vector<4x1xi32> to vector<4x256xi32>
    %11 = vector.broadcast %8 : vector<1x256xi32> to vector<4x256xi32>
    %12 = arith.cmpi eq, %10, %11 : vector<4x256xi32>
    %13 = arith.extui %12 : vector<4x256xi1> to vector<4x256xi32>
    %14 = arith.sitofp %13 : vector<4x256xi32> to vector<4x256xf32>
    %cst = arith.constant dense<0xFF800000> : vector<256xf32>
    %15 = vector.multi_reduction <maximumf>, %6, %cst [0] : vector<4x256xf32> to vector<256xf32>
    %16 = vector.shape_cast %15 : vector<256xf32> to vector<1x256xf32>
    %17 = vector.broadcast %16 : vector<1x256xf32> to vector<4x256xf32>
    %18 = arith.subf %6, %17 : vector<4x256xf32>
    %19 = math.exp %18 : vector<4x256xf32>
    %cst_7 = arith.constant dense<0.000000e+00> : vector<256xf32>
    %20 = vector.multi_reduction <add>, %19, %cst_7 [0] : vector<4x256xf32> to vector<256xf32>
    %21 = vector.shape_cast %20 : vector<256xf32> to vector<1x256xf32>
    %22 = tpu.reciprocal %21 {approx = true} : vector<1x256xf32> -> vector<1x256xf32>
    %23 = vector.broadcast %22 : vector<1x256xf32> to vector<4x256xf32>
    %24 = arith.mulf %19, %23 : vector<4x256xf32>
    %25 = math.log %21 : vector<1x256xf32>
    %26 = arith.addf %16, %25 : vector<1x256xf32>
    %27 = arith.mulf %6, %14 : vector<4x256xf32>
    %cst_8 = arith.constant dense<0.000000e+00> : vector<256xf32>
    %28 = vector.multi_reduction <add>, %27, %cst_8 [0] : vector<4x256xf32> to vector<256xf32>
    %29 = vector.shape_cast %28 : vector<256xf32> to vector<1x256xf32>
    %30 = arith.subf %26, %29 : vector<1x256xf32>
    %31 = arith.mulf %24, %14 : vector<4x256xf32>
    %c0_9 = arith.constant 0 : index
    %c0_10 = arith.constant 0 : index
    %c0_11 = arith.constant 0 : index
    %32 = vector.load %arg5[%c0_9, %c0_10, %c0_11] : memref<1x4x1xf32, #tpu.memory_space<vmem>>, vector<1x4x1xf32>
    %33 = vector.shape_cast %32 : vector<1x4x1xf32> to vector<4x1xf32>
    %cst_12 = arith.constant dense<0.000000e+00> : vector<4xf32>
    %34 = vector.multi_reduction <add>, %31, %cst_12 [1] : vector<4x256xf32> to vector<4xf32>
    %35 = vector.shape_cast %34 : vector<4xf32> to vector<4x1xf32>
    %36 = arith.addf %33, %35 : vector<4x1xf32>
    %c0_13 = arith.constant 0 : index
    %c0_14 = arith.constant 0 : index
    %c0_15 = arith.constant 0 : index
    %37 = vector.load %arg5[%c0_13, %c0_14, %c0_15] : memref<1x4x1xf32, #tpu.memory_space<vmem>>, vector<1x4x1xf32>
    %38 = vector.shape_cast %37 : vector<1x4x1xf32> to vector<4x1xf32>
    %39 = vector.shape_cast %36 : vector<4x1xf32> to vector<1x4x1xf32>
    tpu.vector_store %arg5[%c0_13, %c0_14, %c0_15], %39 {strides = array<i32>} : memref<1x4x1xf32, #tpu.memory_space<vmem>>, vector<1x4x1xf32>,
    %c0_16 = arith.constant 0 : index
    %c0_17 = arith.constant 0 : index
    %c0_18 = arith.constant 0 : index
    %40 = vector.load %arg6[%c0_16, %c0_17, %c0_18] : memref<1x4x1xf32, #tpu.memory_space<vmem>>, vector<1x4x1xf32>
    %41 = vector.shape_cast %40 : vector<1x4x1xf32> to vector<4x1xf32>
    %cst_19 = arith.constant dense<0.000000e+00> : vector<4xf32>
    %42 = vector.multi_reduction <add>, %24, %cst_19 [1] : vector<4x256xf32> to vector<4xf32>
    %43 = vector.shape_cast %42 : vector<4xf32> to vector<4x1xf32>
    %44 = arith.addf %41, %43 : vector<4x1xf32>
    %c0_20 = arith.constant 0 : index
    %c0_21 = arith.constant 0 : index
    %c0_22 = arith.constant 0 : index
    %45 = vector.load %arg6[%c0_20, %c0_21, %c0_22] : memref<1x4x1xf32, #tpu.memory_space<vmem>>, vector<1x4x1xf32>
    %46 = vector.shape_cast %45 : vector<1x4x1xf32> to vector<4x1xf32>
    %47 = vector.shape_cast %44 : vector<4x1xf32> to vector<1x4x1xf32>
    tpu.vector_store %arg6[%c0_20, %c0_21, %c0_22], %47 {strides = array<i32>} : memref<1x4x1xf32, #tpu.memory_space<vmem>>, vector<1x4x1xf32>,
    %c0_23 = arith.constant 0 : index
    %c0_24 = arith.constant 0 : index
    %c0_25 = arith.constant 0 : index
    %48 = vector.load %arg7[%c0_23, %c0_24, %c0_25] : memref<1x4x1xf32, #tpu.memory_space<vmem>>, vector<1x4x1xf32>
    %49 = vector.shape_cast %48 : vector<1x4x1xf32> to vector<4x1xf32>
    %cst_26 = arith.constant dense<0.000000e+00> : vector<4xf32>
    %50 = vector.multi_reduction <add>, %14, %cst_26 [1] : vector<4x256xf32> to vector<4xf32>
    %51 = vector.shape_cast %50 : vector<4xf32> to vector<4x1xf32>
    %52 = arith.addf %49, %51 : vector<4x1xf32>
    %c0_27 = arith.constant 0 : index
    %c0_28 = arith.constant 0 : index
    %c0_29 = arith.constant 0 : index
    %53 = vector.load %arg7[%c0_27, %c0_28, %c0_29] : memref<1x4x1xf32, #tpu.memory_space<vmem>>, vector<1x4x1xf32>
    %54 = vector.shape_cast %53 : vector<1x4x1xf32> to vector<4x1xf32>
    %55 = vector.shape_cast %52 : vector<4x1xf32> to vector<1x4x1xf32>
    tpu.vector_store %arg7[%c0_27, %c0_28, %c0_29], %55 {strides = array<i32>} : memref<1x4x1xf32, #tpu.memory_space<vmem>>, vector<1x4x1xf32>,
    %c0_30 = arith.constant 0 : index
    %c0_31 = arith.constant 0 : index
    %c0_32 = arith.constant 0 : index
    %56 = vector.load %arg8[%c0_30, %c0_31, %c0_32] : memref<1x1x1xf32, #tpu.memory_space<vmem>>, vector<1x1x1xf32>
    %57 = vector.shape_cast %56 : vector<1x1x1xf32> to vector<1x1xf32>
    %58 = vector.shape_cast %30 : vector<1x256xf32> to vector<1x1x256xf32>
    %cst_33 = arith.constant dense<0.000000e+00> : vector<1xf32>
    %59 = vector.multi_reduction <add>, %58, %cst_33 [1, 2] : vector<1x1x256xf32> to vector<1xf32>
    %60 = vector.shape_cast %59 : vector<1xf32> to vector<1x1x1xf32>
    %61 = vector.extract %60[0, 0, 0] : f32 from vector<1x1x1xf32>
    %62 = vector.broadcast %61 : f32 to vector<1x1xf32>
    %63 = arith.addf %57, %62 : vector<1x1xf32>
    %c0_34 = arith.constant 0 : index
    %c0_35 = arith.constant 0 : index
    %c0_36 = arith.constant 0 : index
    %64 = vector.load %arg8[%c0_34, %c0_35, %c0_36] : memref<1x1x1xf32, #tpu.memory_space<vmem>>, vector<1x1x1xf32>
    %65 = vector.shape_cast %64 : vector<1x1x1xf32> to vector<1x1xf32>
    %66 = vector.shape_cast %63 : vector<1x1xf32> to vector<1x1x1xf32>
    tpu.vector_store %arg8[%c0_34, %c0_35, %c0_36], %66 {strides = array<i32>} : memref<1x1x1xf32, #tpu.memory_space<vmem>>, vector<1x1x1xf32>,
    return
  }
  func.func @transform_0(%arg0: i32, %arg1: i32, %arg2: i32) -> (i32, i32, i32) {
    %c1_i32 = arith.constant 1 : i32
    %0 = arith.muli %arg0, %c1_i32 : i32
    %1 = arith.addi %0, %arg2 : i32
    %c0_i32 = arith.constant 0 : i32
    %2 = arith.minsi %1, %c0_i32 : i32
    %c0_i32_0 = arith.constant 0 : i32
    %c0_i32_1 = arith.constant 0 : i32
    return %arg1, %c0_i32_0, %2 : i32, i32, i32
  }
  func.func @transform_1(%arg0: i32, %arg1: i32, %arg2: i32) -> (i32, i32, i32) {
    %c1_i32 = arith.constant 1 : i32
    %0 = arith.muli %arg0, %c1_i32 : i32
    %1 = arith.addi %0, %arg2 : i32
    %c0_i32 = arith.constant 0 : i32
    %2 = arith.minsi %1, %c0_i32 : i32
    %c0_i32_0 = arith.constant 0 : i32
    %c0_i32_1 = arith.constant 0 : i32
    return %arg1, %c0_i32_0, %2 : i32, i32, i32
  }
  func.func @transform_2(%arg0: i32, %arg1: i32, %arg2: i32) -> (i32, i32, i32) {
    %c0_i32 = arith.constant 0 : i32
    %c0_i32_0 = arith.constant 0 : i32
    %c0_i32_1 = arith.constant 0 : i32
    return %arg0, %c0_i32, %c0_i32_0 : i32, i32, i32
  }
  func.func @transform_3(%arg0: i32, %arg1: i32, %arg2: i32) -> (i32, i32, i32) {
    %c0_i32 = arith.constant 0 : i32
    %c0_i32_0 = arith.constant 0 : i32
    %c0_i32_1 = arith.constant 0 : i32
    return %arg0, %c0_i32, %c0_i32_0 : i32, i32, i32
  }
  func.func @transform_4(%arg0: i32, %arg1: i32, %arg2: i32) -> (i32, i32, i32) {
    %c0_i32 = arith.constant 0 : i32
    %c0_i32_0 = arith.constant 0 : i32
    %c0_i32_1 = arith.constant 0 : i32
    return %arg0, %c0_i32, %c0_i32_0 : i32, i32, i32
  }
  func.func @transform_5(%arg0: i32, %arg1: i32, %arg2: i32) -> (i32, i32, i32) {
    %c0_i32 = arith.constant 0 : i32
    %c0_i32_0 = arith.constant 0 : i32
    %c0_i32_1 = arith.constant 0 : i32
    return %arg0, %c0_i32, %c0_i32_0 : i32, i32, i32
  }
}

</mosaic_0001>

<llo_original>
// kernel: _dc_and_ce_loss_impl.1
$region0: #{_dc_and_ce_loss_impl.1}
  #allocation0 [shape = 'u32[]', space=smem, size = 0x4, offset = 0x4, fixed_abs, tag = 'smem constant byte address 0x4 - core index']
  #allocation1 [shape = 'u32[72,128]{1,0:T(1,128)}', space=vmem, size = 0x9000, scoped, tag = 'internal scratch']
  %s0 = inlined_call_operand.vmem [shape: f32[2,4,256], index: 0, kind: input, shape index: {}]
  %s1 = inlined_call_operand.vmem [shape: s32[2,1,256], index: 1, kind: input, shape index: {}]
  %s2 = inlined_call_operand.vmem [shape: f32[1,4,1], index: 2, kind: output, shape index: {0}]
  %s3 = inlined_call_operand.vmem [shape: f32[1,4,1], index: 3, kind: output, shape index: {1}]
  %s4 = inlined_call_operand.vmem [shape: f32[1,4,1], index: 4, kind: output, shape index: {2}]
  %s5 = inlined_call_operand.hbm [shape: f32[1,1,1], index: 5, kind: output, shape index: {3}]
  %6 = xla_tuple %s2, %s3, %s4, %s5
  %s7 = sld [smem:[#allocation0]]
  $region69: #{_dc_and_ce_loss_impl.1} parent=0
    _
  %s9 = ssub.s32 1, %s7
  %s10 = scalar_select 0, %s9, %s7
  $region1: #{_dc_and_ce_loss_impl.1} parent=0
    #allocation2 [shape = 'u8[512]{0}', space=vmem, size = 0x400, scoped, tag = 'output window, operand 3, single buffered']
    #allocation3 [shape = 's32[2]{0}', space=sflag, size = 0x8, scoped, tag = 'scoped memory for _dc_and_ce_loss_impl.1']
    %11 = vsyncpa [#allocation3], 0
    loop: start=0, step=1, limit=4
    $region2: #{_dc_and_ce_loss_impl.1} parent=1 // loop_pre_header
      _
    $region3: #{_dc_and_ce_loss_impl.1} parent=1 // loop_header
      %s13 = sphi 0, %s17
      %p14 = scmp.ge.s32.totalorder %s13, 4
      %s20 = sphi 0, %s39
      %s21 = sphi 0, %s35
      %s22 = sphi 0, %s31
      %s23 = sphi 0, %s20
      %s24 = sphi 0, %s21
      %s25 = sphi 0, %s22
      %s26 = sphi 0, %s23
      %s27 = sphi 0, %s24
      %s28 = sphi 0, %s25
      %s50 = sphi 0, %s52
      %s53 = sphi 0, %s50
      %s54 = sphi 0, %s53
      %s70 = sphi 0, %s54
      %s84 = sphi 0, %s86
      %s87 = sphi 0, %s84
      %s88 = sphi 0, %s87
      %s104 = sphi 0, %s88
      %s110 = sphi 0, %s112
      %s113 = sphi 0, %s110
      %s114 = sphi 0, %s113
      %s130 = sphi 0, %s114
      %s136 = sphi 0, %s138
      %s139 = sphi 0, %s136
      %s140 = sphi 0, %s139
      %s156 = sphi 0, %s140
      %s162 = sphi 0, %s164
      %s165 = sphi 0, %s162
      %s166 = sphi 0, %s165
      %s182 = sphi 0, %s166
      %s188 = sphi 0, %s190
      %s191 = sphi 0, %s188
      %s192 = sphi 0, %s191
      %s208 = sphi 0, %s192
    $region4: #{_dc_and_ce_loss_impl.1} parent=1 // loop_header_branch
      %16 = sbr.rel (%p14) target = $region8
    $region5: #{_dc_and_ce_loss_impl.1} parent=1 // loop_body
      %s18 = ssub.s32 %s13, 1
      %s19 = ssub.s32 %s13, 2
      %s29 = sadd.s32 1, %s22
      %p30 = scmp.ge.s32.totalorder %s29, 1
      %s31 = scalar_select %p30, 0, %s29
      %s32 = sadd.s32 1, %s21
      %s33 = scalar_select %p30, %s32, %s21
      %p34 = scmp.ge.s32.totalorder %s33, 2
      %s35 = scalar_select %p34, 0, %s33
      %s36 = sadd.s32 1, %s20
      %s37 = scalar_select %p34, %s36, %s20
      %p38 = scmp.ge.s32.totalorder %s37, 1
      %s39 = scalar_select %p38, 0, %s37
      %s40 = sadd.s32 %s20, %s22
      %p41 = scmp.lt.s32.totalorder %s40, 0
      %s42 = scalar_select %p41, %s40, 0
      %s43 = sadd.s32 %s39, %s31
      %p44 = scmp.lt.s32.totalorder %s43, 0
      %s45 = scalar_select %p44, %s43, 0
      %s46 = ssub.s32 %s21, %s35
      %s47 = ssub.s32 %s42, %s45
      %s48 = sor.u32 %s46, %s47
      %p49 = scmp.eq.s32.totalorder %s48, 0
      %s51 = sadd.s32 %s50, 1
      %s52 = scalar_select %p49, %s50, %s51
      %p55 = pneg %p49
      %p56 = scmp.eq.s32.totalorder %s13, 1
      %p57 = por %p55, %p56
      %p58 = scmp.ne.s32.totalorder %s50, %s53
      %p59 = scmp.eq.s32.totalorder %s13, 0
      %p60 = por %p58, %p59
      %p61 = scmp.ne.s32.totalorder %s50, %s53
      %p62 = scmp.eq.s32.totalorder %s18, 1
      %p63 = por %p61, %p62
      %p64 = scmp.ne.s32.totalorder %s53, %s54
      %p65 = scmp.eq.s32.totalorder %s18, 0
      %p66 = por %p64, %p65
      %p67 = scmp.ne.s32.totalorder %s53, %s54
      %p68 = scmp.eq.s32.totalorder %s19, 1
      %p69 = por %p67, %p68
      %p71 = scmp.ne.s32.totalorder %s54, %s70
      %p72 = scmp.eq.s32.totalorder %s19, 0
      %p73 = por %p71, %p72
      %s74 = sadd.s32 %s20, %s22
      %p75 = scmp.lt.s32.totalorder %s74, 0
      %s76 = scalar_select %p75, %s74, 0
      %s77 = sadd.s32 %s39, %s31
      %p78 = scmp.lt.s32.totalorder %s77, 0
      %s79 = scalar_select %p78, %s77, 0
      %s80 = ssub.s32 %s21, %s35
      %s81 = ssub.s32 %s76, %s79
      %s82 = sor.u32 %s80, %s81
      %p83 = scmp.eq.s32.totalorder %s82, 0
      %s85 = sadd.s32 %s84, 1
      %s86 = scalar_select %p83, %s84, %s85
      %p89 = pneg %p83
      %p90 = scmp.eq.s32.totalorder %s13, 1
      %p91 = por %p89, %p90
      %p92 = scmp.ne.s32.totalorder %s84, %s87
      %p93 = scmp.eq.s32.totalorder %s13, 0
      %p94 = por %p92, %p93
      %p95 = scmp.ne.s32.totalorder %s84, %s87
      %p96 = scmp.eq.s32.totalorder %s18, 1
      %p97 = por %p95, %p96
      %p98 = scmp.ne.s32.totalorder %s87, %s88
      %p99 = scmp.eq.s32.totalorder %s18, 0
      %p100 = por %p98, %p99
      %p101 = scmp.ne.s32.totalorder %s87, %s88
      %p102 = scmp.eq.s32.totalorder %s19, 1
      %p103 = por %p101, %p102
      %p105 = scmp.ne.s32.totalorder %s88, %s104
      %p106 = scmp.eq.s32.totalorder %s19, 0
      %p107 = por %p105, %p106
      %s108 = ssub.s32 %s20, %s39
      %p109 = scmp.eq.s32.totalorder %s108, 0
      %s111 = sadd.s32 %s110, 1
      %s112 = scalar_select %p109, %s110, %s111
      %p115 = pneg %p109
      %p116 = scmp.eq.s32.totalorder %s13, 1
      %p117 = por %p115, %p116
      %p118 = scmp.ne.s32.totalorder %s110, %s113
      %p119 = scmp.eq.s32.totalorder %s13, 0
      %p120 = por %p118, %p119
      %p121 = scmp.ne.s32.totalorder %s110, %s113
      %p122 = scmp.eq.s32.totalorder %s18, 1
      %p123 = por %p121, %p122
      %p124 = scmp.ne.s32.totalorder %s113, %s114
      %p125 = scmp.eq.s32.totalorder %s18, 0
      %p126 = por %p124, %p125
      %p127 = scmp.ne.s32.totalorder %s113, %s114
      %p128 = scmp.eq.s32.totalorder %s19, 1
      %p129 = por %p127, %p128
      %p131 = scmp.ne.s32.totalorder %s114, %s130
      %p132 = scmp.eq.s32.totalorder %s19, 0
      %p133 = por %p131, %p132
      %s134 = ssub.s32 %s20, %s39
      %p135 = scmp.eq.s32.totalorder %s134, 0
      %s137 = sadd.s32 %s136, 1
      %s138 = scalar_select %p135, %s136, %s137
      %p141 = pneg %p135
      %p142 = scmp.eq.s32.totalorder %s13, 1
      %p143 = por %p141, %p142
      %p144 = scmp.ne.s32.totalorder %s136, %s139
      %p145 = scmp.eq.s32.totalorder %s13, 0
      %p146 = por %p144, %p145
      %p147 = scmp.ne.s32.totalorder %s136, %s139
      %p148 = scmp.eq.s32.totalorder %s18, 1
      %p149 = por %p147, %p148
      %p150 = scmp.ne.s32.totalorder %s139, %s140
      %p151 = scmp.eq.s32.totalorder %s18, 0
      %p152 = por %p150, %p151
      %p153 = scmp.ne.s32.totalorder %s139, %s140
      %p154 = scmp.eq.s32.totalorder %s19, 1
      %p155 = por %p153, %p154
      %p157 = scmp.ne.s32.totalorder %s140, %s156
      %p158 = scmp.eq.s32.totalorder %s19, 0
      %p159 = por %p157, %p158
      %s160 = ssub.s32 %s20, %s39
      %p161 = scmp.eq.s32.totalorder %s160, 0
      %s163 = sadd.s32 %s162, 1
      %s164 = scalar_select %p161, %s162, %s163
      %p167 = pneg %p161
      %p168 = scmp.eq.s32.totalorder %s13, 1
      %p169 = por %p167, %p168
      %p170 = scmp.ne.s32.totalorder %s162, %s165
      %p171 = scmp.eq.s32.totalorder %s13, 0
      %p172 = por %p170, %p171
      %p173 = scmp.ne.s32.totalorder %s162, %s165
      %p174 = scmp.eq.s32.totalorder %s18, 1
      %p175 = por %p173, %p174
      %p176 = scmp.ne.s32.totalorder %s165, %s166
      %p177 = scmp.eq.s32.totalorder %s18, 0
      %p178 = por %p176, %p177
      %p179 = scmp.ne.s32.totalorder %s165, %s166
      %p180 = scmp.eq.s32.totalorder %s19, 1
      %p181 = por %p179, %p180
      %p183 = scmp.ne.s32.totalorder %s166, %s182
      %p184 = scmp.eq.s32.totalorder %s19, 0
      %p185 = por %p183, %p184
      %s186 = ssub.s32 %s20, %s39
      %p187 = scmp.eq.s32.totalorder %s186, 0
      %s189 = sadd.s32 %s188, 1
      %s190 = scalar_select %p187, %s188, %s189
      %p193 = pneg %p187
      %p194 = scmp.eq.s32.totalorder %s13, 1
      %p195 = por %p193, %p194
      %p196 = scmp.ne.s32.totalorder %s188, %s191
      %p197 = scmp.eq.s32.totalorder %s13, 0
      %p198 = por %p196, %p197
      %p199 = scmp.ne.s32.totalorder %s188, %s191
      %p200 = scmp.eq.s32.totalorder %s18, 1
      %p201 = por %p199, %p200
      %p202 = scmp.ne.s32.totalorder %s191, %s192
      %p203 = scmp.eq.s32.totalorder %s18, 0
      %p204 = por %p202, %p203
      %p205 = scmp.ne.s32.totalorder %s191, %s192
      %p206 = scmp.eq.s32.totalorder %s19, 1
      %p207 = por %p205, %p206
      %p209 = scmp.ne.s32.totalorder %s192, %s208
      %p210 = scmp.eq.s32.totalorder %s19, 0
      %p211 = por %p209, %p210
      %p212 = scmp.le.s32.totalorder 1, %s13
      %p213 = scmp.lt.s32.totalorder %s13, 3
      %p214 = pnand %p212, %p213
      %p215 = pneg %p214
      // Predicated region
      $region9: #{_dc_and_ce_loss_impl.1} parent=5 // pred_check
        _
      $region10: #{_dc_and_ce_loss_impl.1} parent=5 // pred_check_branch
        %217 = sbr.rel (%p214) target = $region12
      $region11: #{_dc_and_ce_loss_impl.1} parent=5 // pred_region
        %s218 = ssub.s32 %s13, 1
      $region12: #{_dc_and_ce_loss_impl.1} parent=5 // pred_fallthru
        _
      %p219 = scmp.lt.s32.totalorder %s13, 2
      // Predicated region
      $region13: #{_dc_and_ce_loss_impl.1} parent=5 // pred_check
        %p220 = pneg %p219
      $region14: #{_dc_and_ce_loss_impl.1} parent=5 // pred_check_branch
        %222 = sbr.rel (%p220) target = $region16
      $region15: #{_dc_and_ce_loss_impl.1} parent=5 // pred_region
        // Predicated region
        $region17: #{_dc_and_ce_loss_impl.1} parent=15 // pred_check
          %p223 = pneg %p60
        $region18: #{_dc_and_ce_loss_impl.1} parent=15 // pred_check_branch
          %225 = sbr.rel (%p223) target = $region20
        $region19: #{_dc_and_ce_loss_impl.1} parent=15 // pred_region
          %s226 = sadd.s32 %s20, %s22
          %p227 = scmp.lt.s32.totalorder %s226, 0
          %s228 = scalar_select %p227, %s226, 0
          %s229 = smul.u32 2, %s228
          %p230 = scmp.lt.s32.totalorder %s21, 1
          %s231 = scalar_select %p230, %s21, 1
          %p232 = scmp.lt.s32.totalorder %s229, 1
          %s233 = scalar_select %p232, %s229, 1
          %s234 = smul.addr %s231, 2
          %s235 = sadd.s32 %s233, %s234
          %s236 = smul.addr %s235, 4
          %s237 = scalar_lea.vmem %s0, %s236
          %s238 = sadd.s32 %s20, %s22
          %p239 = scmp.lt.s32.totalorder %s238, 0
          %s240 = scalar_select %p239, %s238, 0
          %s241 = smul.u32 2, %s240
        $region20: #{_dc_and_ce_loss_impl.1} parent=15 // pred_fallthru
          _
        // Predicated region
        $region21: #{_dc_and_ce_loss_impl.1} parent=15 // pred_check
          %p242 = pneg %p94
        $region22: #{_dc_and_ce_loss_impl.1} parent=15 // pred_check_branch
          %244 = sbr.rel (%p242) target = $region24
        $region23: #{_dc_and_ce_loss_impl.1} parent=15 // pred_region
          %s245 = sadd.s32 %s20, %s22
          %p246 = scmp.lt.s32.totalorder %s245, 0
          %s247 = scalar_select %p246, %s245, 0
          %s248 = smul.u32 2, %s247
          %p249 = scmp.lt.s32.totalorder %s21, 1
          %s250 = scalar_select %p249, %s21, 1
          %p251 = scmp.lt.s32.totalorder %s248, 1
          %s252 = scalar_select %p251, %s248, 1
          %s253 = smul.addr %s250, 2
          %s254 = sadd.s32 %s252, %s253
          %s255 = scalar_lea.vmem %s1, %s254
          %s256 = sadd.s32 %s20, %s22
          %p257 = scmp.lt.s32.totalorder %s256, 0
          %s258 = scalar_select %p257, %s256, 0
          %s259 = smul.u32 2, %s258
        $region24: #{_dc_and_ce_loss_impl.1} parent=15 // pred_fallthru
          _
      $region16: #{_dc_and_ce_loss_impl.1} parent=5 // pred_fallthru
        _
      %p260 = scmp.le.s32.totalorder 1, %s13
      %p261 = scmp.lt.s32.totalorder %s13, 3
      %p262 = pnand %p260, %p261
      %p263 = pneg %p262
      // Predicated region
      $region25: #{_dc_and_ce_loss_impl.1} parent=5 // pred_check
        _
      $region26: #{_dc_and_ce_loss_impl.1} parent=5 // pred_check_branch
        %265 = sbr.rel (%p262) target = $region28
      $region27: #{_dc_and_ce_loss_impl.1} parent=5 // pred_region
        %s266 = ssub.s32 %s13, 1
        %s267 = sadd.s32 %s23, %s25
        %p268 = scmp.lt.s32.totalorder %s267, 0
        %s269 = scalar_select %p268, %s267, 0
        %s270 = smul.u32 2, %s269
        %p271 = scmp.lt.s32.totalorder %s24, 1
        %s272 = scalar_select %p271, %s24, 1
        %p273 = scmp.lt.s32.totalorder %s270, 1
        %s274 = scalar_select %p273, %s270, 1
        %s275 = smul.addr %s272, 2
        %s276 = sadd.s32 %s274, %s275
        %s277 = smul.addr %s276, 4
        %s278 = scalar_lea.vmem %s0, %s277
        %p279 = pneg %p66
        %p280 = pneg %p63
        %s281 = sadd.s32 %s23, %s25
        %p282 = scmp.lt.s32.totalorder %s281, 0
        %s283 = scalar_select %p282, %s281, 0
        %s284 = smul.u32 2, %s283
        %p285 = scmp.lt.s32.totalorder %s24, 1
        %s286 = scalar_select %p285, %s24, 1
        %p287 = scmp.lt.s32.totalorder %s284, 1
        %s288 = scalar_select %p287, %s284, 1
        %s289 = smul.addr %s286, 2
        %s290 = sadd.s32 %s288, %s289
        %s291 = scalar_lea.vmem %s1, %s290
        %p292 = pneg %p100
        %p293 = pneg %p97
        %p294 = pneg %p126
        %p295 = pneg %p123
        %p296 = scmp.lt.s32.totalorder %s23, 0
        %s297 = scalar_select %p296, %s23, 0
        %s298 = smul.addr %s297, 4
        %s299 = scalar_lea.vmem %s2, %s298
        %p300 = pneg %p152
        %p301 = pneg %p149
        %p302 = scmp.lt.s32.totalorder %s23, 0
        %s303 = scalar_select %p302, %s23, 0
        %s304 = smul.addr %s303, 4
        %s305 = scalar_lea.vmem %s3, %s304
        %p306 = pneg %p178
        %p307 = pneg %p175
        %p308 = scmp.lt.s32.totalorder %s23, 0
        %s309 = scalar_select %p308, %s23, 0
        %s310 = smul.addr %s309, 4
        %s311 = scalar_lea.vmem %s4, %s310
        %p312 = pneg %p204
        %p313 = pneg %p201
        %s314 = sadd.s32 %s23, %s25
        %p315 = scmp.lt.s32.totalorder %s314, 0
        %s316 = scalar_select %p315, %s314, 0
        %s317 = smul.u32 2, %s316
        %p318 = scmp.lt.s32.totalorder %s24, 1
        %s319 = scalar_select %p318, %s24, 1
        %p320 = scmp.lt.s32.totalorder %s317, 1
        %s321 = scalar_select %p320, %s317, 1
        %s322 = smul.addr %s319, 2
        %s323 = sadd.s32 %s321, %s322
        %s324 = smul.addr %s323, 4
        %s325 = scalar_lea.vmem %s0, %s324
        %s326 = sadd.s32 %s23, %s25
        %p327 = scmp.lt.s32.totalorder %s326, 0
        %s328 = scalar_select %p327, %s326, 0
        %s329 = smul.u32 2, %s328
        %s330 = sadd.s32 %s23, %s25
        %p331 = scmp.lt.s32.totalorder %s330, 0
        %s332 = scalar_select %p331, %s330, 0
        %s333 = smul.u32 2, %s332
        %p334 = scmp.lt.s32.totalorder %s24, 1
        %s335 = scalar_select %p334, %s24, 1
        %p336 = scmp.lt.s32.totalorder %s333, 1
        %s337 = scalar_select %p336, %s333, 1
        %s338 = smul.addr %s335, 2
        %s339 = sadd.s32 %s337, %s338
        %s340 = scalar_lea.vmem %s1, %s339
        %s341 = sadd.s32 %s23, %s25
        %p342 = scmp.lt.s32.totalorder %s341, 0
        %s343 = scalar_select %p342, %s341, 0
        %s344 = smul.u32 2, %s343
        %p345 = scmp.lt.s32.totalorder %s23, 0
        %s346 = scalar_select %p345, %s23, 0
        %s347 = smul.addr %s346, 4
        %s348 = scalar_lea.vmem %s2, %s347
        %p349 = scmp.lt.s32.totalorder %s23, 0
        %s350 = scalar_select %p349, %s23, 0
        %s351 = smul.addr %s350, 4
        %s352 = scalar_lea.vmem %s3, %s351
        %p353 = scmp.lt.s32.totalorder %s23, 0
        %s354 = scalar_select %p353, %s23, 0
        %s355 = smul.addr %s354, 4
        %s356 = scalar_lea.vmem %s4, %s355
        %p357 = scmp.eq.s32.totalorder %s24, 0
        %p358 = scmp.eq.s32.totalorder %s25, 0
        %p359 = pnand %p357, %p358
        %p360 = pneg %p359
        // Predicated region
        $region29: #{_dc_and_ce_loss_impl.1} parent=27 // pred_check
          _
        $region30: #{_dc_and_ce_loss_impl.1} parent=27 // pred_check_branch
          %362 = sbr.rel (%p359) target = $region32
        $region31: #{_dc_and_ce_loss_impl.1} parent=27 // pred_region
          %vm363 = vcmask 3072
          %364 = vst.msk [vmem:[%s348] sm:$0xf] %vm363, 0.0
          %365 = vst.msk [vmem:[%s352] sm:$0xf] %vm363, 0.0
          %366 = vst.msk [vmem:[%s356] sm:$0xf] %vm363, 0.0
          %vm367 = vcmask 0
          %368 = vst.msk [vmem:[#allocation2] sm:$0x1] %vm367, 0.0
        $region32: #{_dc_and_ce_loss_impl.1} parent=27 // pred_fallthru
          _
        %v369 = vld [vmem:[%s325] sm:$0xff]
        %v370 = vld [vmem:[%s340] sm:$0x3]
        %v371 = vlaneseq
        %v372 = vshrl.u32 %v371, 7
        %v373 = vperm.slane %v370, 0
        %v374 = vperm.slane %v370, 1
        %vm375 = vcmp.eq.s32.totalorder %v372, %v373
        %vm376 = vcmp.eq.s32.totalorder %v372, %v374
        %v377 = vsel %vm375, 1, 0
        %v378 = vsel %vm376, 1, 0
        %v379 = vcvt.s32.f32 %v377
        %v380 = vcvt.s32.f32 %v378
        %382 = vst [vmem:[#allocation1] ss:$2 sm:$0xff] %v369
        %v383 = vld.sshfl [vmem:[#allocation1] sm:$0xff pattern:$0x75316420]
        %v384 = vld.sshfl [vmem:[#allocation1 + $0x8] sm:$0xff pattern:$0x75316420]
        %vm387 = vcmask 1043456
        %v388 = vsel %vm387, %v383, -inf
        %v389 = vrot.slane %v388, 4
        %v390 = vmax.f32 %v388, %v389
        %v391 = vrot.slane %v390, 2
        %v392 = vmax.f32 %v390, %v391
        %v393 = vrot.slane %v392, 1
        %v394 = vmax.f32 %v392, %v393
        %v395 = vsel %vm387, %v384, -inf
        %v396 = vrot.slane %v395, 4
        %v397 = vmax.f32 %v395, %v396
        %v398 = vrot.slane %v397, 2
        %v399 = vmax.f32 %v397, %v398
        %v400 = vrot.slane %v399, 1
        %v401 = vmax.f32 %v399, %v400
        %v404 = vrot.slane %v401, 4
        %v405 = vsel %vm387, %v394, %v404
        %v407 = vsub.f32 %v369, %v405
        %v408 = vmul.f32 %v407, 1.442695
        %v409 = vpow.pop %v408
        %411 = vst [vmem:[#allocation1] ss:$2 sm:$0xff] %v409
        %v412 = vld.sshfl [vmem:[#allocation1] sm:$0xff pattern:$0x75316420]
        %v413 = vld.sshfl [vmem:[#allocation1 + $0x8] sm:$0xff pattern:$0x75316420]
        %v416 = vsel %vm387, %v412, 0.0
        %v417 = vrot.slane %v416, 4
        %v418 = vadd.f32 %v416, %v417
        %v419 = vrot.slane %v418, 2
        %v420 = vadd.f32 %v418, %v419
        %v421 = vrot.slane %v420, 1
        %v422 = vadd.f32 %v420, %v421
        %v423 = vsel %vm387, %v413, 0.0
        %v424 = vrot.slane %v423, 4
        %v425 = vadd.f32 %v423, %v424
        %v426 = vrot.slane %v425, 2
        %v427 = vadd.f32 %v425, %v426
        %v428 = vrot.slane %v427, 1
        %v429 = vadd.f32 %v427, %v428
        %v430 = vrcp.pop %v422
        %v431 = vrcp.pop %v429
        %v434 = vrot.slane %v431, 4
        %v435 = vsel %vm387, %v430, %v434
        %v437 = vmul.f32 %v409, %v435
        %v438 = vlog2.pop %v422
        %v439 = vmul.f32 %v438, 0.6931472
        %v440 = vlog2.pop %v429
        %v441 = vmul.f32 %v440, 0.6931472
        %v442 = vadd.f32 %v394, %v439
        %v443 = vadd.f32 %v401, %v441
        %v446 = vrot.slane %v380, 4
        %v447 = vsel %vm387, %v379, %v446
        %v449 = vmul.f32 %v369, %v447
        %451 = vst [vmem:[#allocation1] ss:$2 sm:$0xff] %v449
        %v452 = vld.sshfl [vmem:[#allocation1] sm:$0xff pattern:$0x75316420]
        %v453 = vld.sshfl [vmem:[#allocation1 + $0x8] sm:$0xff pattern:$0x75316420]
        %v456 = vsel %vm387, %v452, 0.0
        %v457 = vrot.slane %v456, 4
        %v458 = vadd.f32 %v456, %v457
        %v459 = vrot.slane %v458, 2
        %v460 = vadd.f32 %v458, %v459
        %v461 = vrot.slane %v460, 1
        %v462 = vadd.f32 %v460, %v461
        %v463 = vsel %vm387, %v453, 0.0
        %v464 = vrot.slane %v463, 4
        %v465 = vadd.f32 %v463, %v464
        %v466 = vrot.slane %v465, 2
        %v467 = vadd.f32 %v465, %v466
        %v468 = vrot.slane %v467, 1
        %v469 = vadd.f32 %v467, %v468
        %v470 = vsub.f32 %v442, %v462
        %v471 = vsub.f32 %v443, %v469
        %v472 = vmul.f32 %v437, %v447
        %v473 = vld [vmem:[%s348] sm:$0xf]
        %475 = vst [vmem:[#allocation1] ss:$2 sm:$0xff] %v472
        %v476 = vld.sshfl [vmem:[#allocation1] sm:$0xff pattern:$0x75316420]
        %v477 = vld.sshfl [vmem:[#allocation1 + $0x8] sm:$0xff pattern:$0x75316420]
        %v480 = vsel %vm387, %v476, 0.0
        %v481 = vsel %vm387, %v477, 0.0
        %v482 = vadd.f32 %v480, %v481
        %483 = vadd.xlane.f32.xlu0 %v482
        %v484 = vpop.xlane.xlu0 %483
        %v485 = vadd.f32 %v473, %v484
        %vm486 = vcmask 3072
        %487 = vst.msk [vmem:[%s348] sm:$0xf] %vm486, %v485
        %v488 = vld [vmem:[%s352] sm:$0xf]
        %490 = vst [vmem:[#allocation1] ss:$2 sm:$0xff] %v437
        %v491 = vld.sshfl [vmem:[#allocation1] sm:$0xff pattern:$0x75316420]
        %v492 = vld.sshfl [vmem:[#allocation1 + $0x8] sm:$0xff pattern:$0x75316420]
        %v495 = vsel %vm387, %v491, 0.0
        %v496 = vsel %vm387, %v492, 0.0
        %v497 = vadd.f32 %v495, %v496
        %498 = vadd.xlane.f32.xlu0 %v497
        %v499 = vpop.xlane.xlu0 %498
        %v500 = vadd.f32 %v488, %v499
        %501 = vst.msk [vmem:[%s352] sm:$0xf] %vm486, %v500
        %v502 = vld [vmem:[%s356] sm:$0xf]
        %v503 = vsel %vm387, %v379, 0.0
        %v504 = vsel %vm387, %v380, 0.0
        %v505 = vadd.f32 %v503, %v504
        %506 = vadd.xlane.f32.xlu0 %v505
        %v507 = vpop.xlane.xlu0 %506
        %v508 = vadd.f32 %v502, %v507
        %509 = vst.msk [vmem:[%s356] sm:$0xf] %vm486, %v508
        %v510 = vld [vmem:[#allocation2] sm:$0x1]
        %vm511 = vcmask 1040384
        %v512 = vsel %vm511, %v470, 0.0
        %v513 = vsel %vm511, %v471, 0.0
        %v514 = vadd.f32 %v512, %v513
        %515 = vadd.xlane.f32.xlu0 %v514
        %v516 = vpop.xlane.xlu0 %515
        %v517 = vrot.slane %v516, 4
        %v518 = vadd.f32 %v516, %v517
        %v519 = vrot.slane %v518, 2
        %v520 = vadd.f32 %v518, %v519
        %v521 = vrot.slane %v520, 1
        %v522 = vadd.f32 %v520, %v521
        %s523 = vtos %v522
        %v524 = vstv %s523
        %v525 = vadd.f32 %v510, %v524
        %vm526 = vcmask 0
        %527 = vst.msk [vmem:[#allocation2] sm:$0x1] %vm526, %v525
        %p528 = scmp.lt.s32.totalorder %s23, 0
        %s529 = scalar_select %p528, %s23, 0
        %s530 = smul.addr %s529, 4
        %s531 = scalar_lea.vmem %s2, %s530
        %p532 = scmp.lt.s32.totalorder %s23, 0
        %s533 = scalar_select %p532, %s23, 0
        %s534 = smul.addr %s533, 4
        %s535 = scalar_lea.vmem %s3, %s534
        %p536 = scmp.lt.s32.totalorder %s23, 0
        %s537 = scalar_select %p536, %s23, 0
        %s538 = smul.addr %s537, 4
        %s539 = scalar_lea.vmem %s4, %s538
        // Predicated region
        $region33: #{_dc_and_ce_loss_impl.1} parent=27 // pred_check
          %p540 = pneg %p123
        $region34: #{_dc_and_ce_loss_impl.1} parent=27 // pred_check_branch
          %542 = sbr.rel (%p540) target = $region36
        $region35: #{_dc_and_ce_loss_impl.1} parent=27 // pred_region
          _
        $region36: #{_dc_and_ce_loss_impl.1} parent=27 // pred_fallthru
          _
        // Predicated region
        $region37: #{_dc_and_ce_loss_impl.1} parent=27 // pred_check
          %p543 = pneg %p149
        $region38: #{_dc_and_ce_loss_impl.1} parent=27 // pred_check_branch
          %545 = sbr.rel (%p543) target = $region40
        $region39: #{_dc_and_ce_loss_impl.1} parent=27 // pred_region
          _
        $region40: #{_dc_and_ce_loss_impl.1} parent=27 // pred_fallthru
          _
        // Predicated region
        $region41: #{_dc_and_ce_loss_impl.1} parent=27 // pred_check
          %p546 = pneg %p175
        $region42: #{_dc_and_ce_loss_impl.1} parent=27 // pred_check_branch
          %548 = sbr.rel (%p546) target = $region44
        $region43: #{_dc_and_ce_loss_impl.1} parent=27 // pred_region
          _
        $region44: #{_dc_and_ce_loss_impl.1} parent=27 // pred_fallthru
          _
        // Predicated region
        $region45: #{_dc_and_ce_loss_impl.1} parent=27 // pred_check
          %p549 = pneg %p201
        $region46: #{_dc_and_ce_loss_impl.1} parent=27 // pred_check_branch
          %551 = sbr.rel (%p549) target = $region48
        $region47: #{_dc_and_ce_loss_impl.1} parent=27 // pred_region
          %553 = vsyncadd [#allocation3], 0
          %s554 = scalar_lea.hbm %s5, %s23
          %s556 = sshll.u32 [#allocation2], 4
          %s557 = int_to_ptr.vmem [resolvable:$true] %s556
          %s558 = sshll.u32 %s554, 4
          %s559 = int_to_ptr.hbm [resolvable:$true] %s558
          %561 = dma.vmem_to_hbm [thread:$0]  %s557, 16, %s559, [#allocation3]
        $region48: #{_dc_and_ce_loss_impl.1} parent=27 // pred_fallthru
          _
        // Predicated region
        $region49: #{_dc_and_ce_loss_impl.1} parent=27 // pred_check
          %p562 = pneg %p123
        $region50: #{_dc_and_ce_loss_impl.1} parent=27 // pred_check_branch
          %564 = sbr.rel (%p562) target = $region52
        $region51: #{_dc_and_ce_loss_impl.1} parent=27 // pred_region
          %p565 = scmp.lt.s32.totalorder %s23, 0
          %s566 = scalar_select %p565, %s23, 0
          %s567 = smul.addr %s566, 4
          %s568 = scalar_lea.vmem %s2, %s567
        $region52: #{_dc_and_ce_loss_impl.1} parent=27 // pred_fallthru
          _
        // Predicated region
        $region53: #{_dc_and_ce_loss_impl.1} parent=27 // pred_check
          %p569 = pneg %p149
        $region54: #{_dc_and_ce_loss_impl.1} parent=27 // pred_check_branch
          %571 = sbr.rel (%p569) target = $region56
        $region55: #{_dc_and_ce_loss_impl.1} parent=27 // pred_region
          %p572 = scmp.lt.s32.totalorder %s23, 0
          %s573 = scalar_select %p572, %s23, 0
          %s574 = smul.addr %s573, 4
          %s575 = scalar_lea.vmem %s3, %s574
        $region56: #{_dc_and_ce_loss_impl.1} parent=27 // pred_fallthru
          _
        // Predicated region
        $region57: #{_dc_and_ce_loss_impl.1} parent=27 // pred_check
          %p576 = pneg %p175
        $region58: #{_dc_and_ce_loss_impl.1} parent=27 // pred_check_branch
          %578 = sbr.rel (%p576) target = $region60
        $region59: #{_dc_and_ce_loss_impl.1} parent=27 // pred_region
          %p579 = scmp.lt.s32.totalorder %s23, 0
          %s580 = scalar_select %p579, %s23, 0
          %s581 = smul.addr %s580, 4
          %s582 = scalar_lea.vmem %s4, %s581
        $region60: #{_dc_and_ce_loss_impl.1} parent=27 // pred_fallthru
          _
        // Predicated region
        $region61: #{_dc_and_ce_loss_impl.1} parent=27 // pred_check
          %p583 = pneg %p201
        $region62: #{_dc_and_ce_loss_impl.1} parent=27 // pred_check_branch
          %585 = sbr.rel (%p583) target = $region64
        $region63: #{_dc_and_ce_loss_impl.1} parent=27 // pred_region
          %587 = dma.done [#allocation3], 16
        $region64: #{_dc_and_ce_loss_impl.1} parent=27 // pred_fallthru
          _
      $region28: #{_dc_and_ce_loss_impl.1} parent=5 // pred_fallthru
        _
      %p588 = scmp.le.s32.totalorder 2, %s13
      // Predicated region
      $region65: #{_dc_and_ce_loss_impl.1} parent=5 // pred_check
        %p589 = pneg %p588
      $region66: #{_dc_and_ce_loss_impl.1} parent=5 // pred_check_branch
        %591 = sbr.rel (%p589) target = $region68
      $region67: #{_dc_and_ce_loss_impl.1} parent=5 // pred_region
        %s592 = ssub.s32 %s13, 2
      $region68: #{_dc_and_ce_loss_impl.1} parent=5 // pred_fallthru
        _
    $region6: #{_dc_and_ce_loss_impl.1} parent=1 // loop_footer
      %s17 = sadd.s32 1, %s13
    $region7: #{_dc_and_ce_loss_impl.1} parent=1 // loop_footer_branch
      %12 = sbr.rel target = $region3
    $region8: #{_dc_and_ce_loss_impl.1} parent=1 // loop_exit
      _
    %593 = vsyncpa [#allocation3], 1
    %s594 = scalar_lea.sflag [#allocation3], 1
    %595 = vsyncpa %s594, 1

</llo_original>
